<compile_context>
chip_gen: v6e
topology: v6e:2x2x1
jax: 0.10.0
libtpu: 0.0.40
codegen_flags: <defaults>
</compile_context>

<pallas_src>
import functools

import jax
import jax.numpy as jnp
from jax.experimental import pallas as pl
from jax.experimental.pallas import tpu as pltpu


def _neg_limit(dtype):
    if jnp.issubdtype(dtype, jnp.floating):
        return jnp.array(-jnp.inf, dtype=dtype)
    return jnp.array(jnp.iinfo(dtype).min, dtype=dtype)


def _c1_even_kernel(*refs, num_scales, stride, gh, gw, out_h, out_w, h, w):
    """C1 for even pooling size (pad == stride == size // 2).

    refs = (scale_0, ..., scale_{S-1}, out, rg_scratch, g_scratch)
      scale refs: [TB, H, W]            (H on sublanes, W on lanes)
      out ref:    [TB, OH, OW]
      rg_scratch: [TB, GH, W]           per-row-group maxima
      g_scratch:  [TB, OH + 1, OW + 1]  group-max grid with -inf borders
    """
    in_refs = refs[:num_scales]
    o_ref = refs[num_scales]
    rg_ref = refs[num_scales + 1]
    g_ref = refs[num_scales + 2]

    neg = _neg_limit(g_ref.dtype)
    # Border windows only see the groups that exist; everything else (front
    # pad row/col, trailing rows/cols when out_h > gh / out_w > gw) is -inf.
    g_ref[...] = jnp.full(g_ref.shape, neg, dtype=g_ref.dtype)

    # Row pass: max over scales and over each non-overlapping stride-row
    # group.  Non-overlapping groups -> every input element is read once.
    for j in range(gh):
        r0 = j * stride
        r1 = min(r0 + stride, h)
        grp = in_refs[0][:, r0:r1, :]
        for r in in_refs[1:]:
            grp = jnp.maximum(grp, r[:, r0:r1, :])
        rg_ref[:, j:j + 1, :] = jnp.max(grp, axis=1, keepdims=True)

    # Column pass: max over each non-overlapping stride-column group, written
    # into the interior of the -inf padded grid.
    for i in range(gw):
        c0 = i * stride
        c1 = min(c0 + stride, w)
        g_ref[:, 1:1 + gh, 1 + i:2 + i] = jnp.max(
            rg_ref[:, :, c0:c1], axis=2, keepdims=True)

    # With pad == stride, output window `oh` covers rows
    # [(oh-1)*stride, (oh+1)*stride) clipped to [0, H), i.e. exactly row
    # groups {oh-1, oh}; likewise for columns.  So every output element is the
    # max of a 2x2 neighbourhood of group maxima.
    top = jnp.maximum(g_ref[:, 0:out_h, 0:out_w],
                      g_ref[:, 0:out_h, 1:out_w + 1])
    bot = jnp.maximum(g_ref[:, 1:out_h + 1, 0:out_w],
                      g_ref[:, 1:out_h + 1, 1:out_w + 1])
    o_ref[...] = jnp.maximum(top, bot).astype(o_ref.dtype)


def _c1_generic_kernel(*refs, num_scales, size, stride, pad, out_h, out_w, h, w):
    """Fallback for odd pooling sizes (overlapping windows, pad = size // 2).

    refs = (scale_0, ..., scale_{S-1}, out, rp_scratch)
      rp_scratch: [TB, OH, W]  row-pooled intermediate
    """
    in_refs = refs[:num_scales]
    o_ref = refs[num_scales]
    rp_ref = refs[num_scales + 1]

    # Row pass: per output row, max over scales and over the window's rows.
    for oh in range(out_h):
        r0 = max(oh * stride - pad, 0)
        r1 = min(oh * stride - pad + size, h)
        grp = in_refs[0][:, r0:r1, :]
        for r in in_refs[1:]:
            grp = jnp.maximum(grp, r[:, r0:r1, :])
        rp_ref[:, oh:oh + 1, :] = jnp.max(grp, axis=1, keepdims=True)

    # Column pass.
    for ow in range(out_w):
        c0 = max(ow * stride - pad, 0)
        c1 = min(ow * stride - pad + size, w)
        o_ref[:, :, ow:ow + 1] = jnp.max(
            rp_ref[:, :, c0:c1], axis=2, keepdims=True).astype(o_ref.dtype)


def _pick_batch_tile(b, per_image_bytes, budget_bytes):
    """Largest divisor of `b` whose (double-buffered) tile fits the VMEM
    budget, preferring >= 2 grid steps so the pipeline / megacore has work."""
    cap = max(1, budget_bytes // max(per_image_bytes, 1))
    divisors = [d for d in range(1, b + 1) if b % d == 0]
    fitting = [d for d in divisors if d <= cap] or [1]
    tb = max(fitting)
    if b > 1 and tb == b:
        smaller = [d for d in fitting if d < b]
        if smaller:
            tb = max(smaller)
    return tb


def c1_forward(s1_outputs, size):
    """JAX/Pallas equivalent of C1.forward.

    s1_outputs: list of arrays, each [N, C, H, W] (NCHW, like PyTorch).
    Returns: [N, C, OH, OW].
    """
    stride = size // 2
    pad = size // 2
    assert stride >= 1, "C1 pooling size must be >= 2"
    s = len(s1_outputs)
    n, c, h, w = s1_outputs[0].shape
    out_h = (h + 2 * pad - size) // stride + 1
    out_w = (w + 2 * pad - size) // stride + 1
    b = n * c
    dtype = s1_outputs[0].dtype
    itemsize = jnp.dtype(dtype).itemsize

    # Free (metadata-only) reshape: NCHW memory layout untouched.
    xs = [x.reshape(b, h, w) for x in s1_outputs]

    even = (size == 2 * stride)     # HMAX uses even sizes; pad == stride.
    gh = -(-h // stride)            # number of row groups
    gw = -(-w // stride)            # number of column groups

    # Per-image VMEM bytes of one grid step: double-buffered inputs + output
    # plus single-buffered scratch.  Budget keeps the same tiling valid on
    # v7x's smaller (64 MiB) VMEM under a 32 MiB scoped limit.
    if even:
        scratch_per_image = gh * w + (out_h + 1) * (out_w + 1)
    else:
        scratch_per_image = out_h * w
    per_image = (2 * (s * h * w + out_h * out_w) + scratch_per_image) * itemsize
    tb = _pick_batch_tile(b, per_image, budget_bytes=8 * 1024 * 1024)
    grid = (b // tb,)

    if even:
        kernel = functools.partial(
            _c1_even_kernel, num_scales=s, stride=stride,
            gh=gh, gw=gw, out_h=out_h, out_w=out_w, h=h, w=w)
        scratch_shapes = [pltpu.VMEM((tb, gh, w), dtype),
                          pltpu.VMEM((tb, out_h + 1, out_w + 1), dtype)]
    else:
        kernel = functools.partial(
            _c1_generic_kernel, num_scales=s, size=size, stride=stride,
            pad=pad, out_h=out_h, out_w=out_w, h=h, w=w)
        scratch_shapes = [pltpu.VMEM((tb, out_h, w), dtype)]

    cost = pl.CostEstimate(
        flops=b * h * w * s + 2 * b * (gh * w + out_h * out_w),
        transcendentals=0,
        bytes_accessed=itemsize * (s * b * h * w + b * out_h * out_w),
    )

    out = pl.pallas_call(
        kernel,
        out_shape=jax.ShapeDtypeStruct((b, out_h, out_w), dtype),
        grid_spec=pltpu.PrefetchScalarGridSpec(
            num_scalar_prefetch=0,
            grid=grid,
            in_specs=[pl.BlockSpec((tb, h, w), lambda i: (i, 0, 0))
                      for _ in range(s)],
            out_specs=pl.BlockSpec((tb, out_h, out_w), lambda i: (i, 0, 0)),
            scratch_shapes=scratch_shapes,
        ),
        compiler_params=pltpu.CompilerParams(
            dimension_semantics=("parallel",),
            vmem_limit_bytes=32 * 1024 * 1024,
        ),
        cost_estimate=cost,
    )(*xs)

    return out.reshape(n, c, out_h, out_w)


if __name__ == "__main__":
    key = jax.random.PRNGKey(0)

    # Small shapes consistent with the module's forward: a list of S1 outputs
    # (different scales), each [N, C, H, W].
    N, C, H, W = 2, 4, 16, 16
    num_scales = 2
    size = 6  # C1(size=6) -> MaxPool2d(kernel=6, stride=3, padding=3)

    keys = jax.random.split(key, num_scales)
    s1_outputs = [
        jax.random.normal(k, (N, C, H, W), dtype=jnp.float32) for k in keys
    ]

    out = c1_forward(s1_outputs, size)
    out = jax.block_until_ready(out)

    # Independent reference: max over scales + reduce_window max-pool
    # (reduce_window pads with -inf, matching torch MaxPool2d padding).
    stride = size // 2
    pad = size // 2
    x_max = jnp.max(jnp.stack(s1_outputs, axis=0), axis=0)
    ref = jax.lax.reduce_window(
        x_max,
        -jnp.inf,
        jax.lax.max,
        window_dimensions=(1, 1, size, size),
        window_strides=(1, 1, stride, stride),
        padding=((0, 0), (0, 0), (pad, pad), (pad, pad)),
    )

    assert out.shape == ref.shape, (out.shape, ref.shape)
    assert bool(jnp.allclose(out, ref, atol=1e-6)), "Pallas C1 output mismatch"
    print("KERNEL_OK")
</pallas_src>

<mosaic_0001>
module attributes {stable_mosaic.version = 11 : i64} {
  func.func @_c1_even_kernel(%arg0: i32, %arg1: memref<4x16x16xf32, #tpu.memory_space<vmem>>, %arg2: memref<4x16x16xf32, #tpu.memory_space<vmem>>, %arg3: memref<4x6x6xf32, #tpu.memory_space<vmem>>, %arg4: memref<4x6x16xf32, #tpu.memory_space<vmem>>, %arg5: memref<4x7x7xf32, #tpu.memory_space<vmem>>) attributes {dimension_semantics = [#tpu.dimension_semantics<parallel>], iteration_bounds = array<i64: 2>, scalar_prefetch = 0 : i64, scratch_operands = 2 : i64, tpu.core_type = #tpu.core_type<tc>, window_params = [{transform_indices = @transform_0, window_bounds = array<i64: 4, 16, 16>}, {transform_indices = @transform_1, window_bounds = array<i64: 4, 16, 16>}, {transform_indices = @transform_2, window_bounds = array<i64: 4, 6, 6>}]} {
    %cst = arith.constant 0xFF800000 : f32
    %0 = vector.broadcast %cst : f32 to vector<4x7x7xf32>
    %c0 = arith.constant 0 : index
    %c0_0 = arith.constant 0 : index
    %c0_1 = arith.constant 0 : index
    %1 = vector.load %arg5[%c0, %c0_0, %c0_1] : memref<4x7x7xf32, #tpu.memory_space<vmem>>, vector<4x7x7xf32>
    tpu.vector_store %arg5[%c0, %c0_0, %c0_1], %0 {strides = array<i32>} : memref<4x7x7xf32, #tpu.memory_space<vmem>>, vector<4x7x7xf32>,
    %c0_2 = arith.constant 0 : index
    %c0_3 = arith.constant 0 : index
    %c0_4 = arith.constant 0 : index
    %2 = vector.load %arg1[%c0_2, %c0_3, %c0_4] : memref<4x16x16xf32, #tpu.memory_space<vmem>>, vector<4x3x16xf32>
    %c0_5 = arith.constant 0 : index
    %c0_6 = arith.constant 0 : index
    %c0_7 = arith.constant 0 : index
    %3 = vector.load %arg2[%c0_5, %c0_6, %c0_7] : memref<4x16x16xf32, #tpu.memory_space<vmem>>, vector<4x3x16xf32>
    %4 = arith.maximumf %2, %3 : vector<4x3x16xf32>
    %cst_8 = arith.constant dense<0xFF800000> : vector<4x16xf32>
    %5 = vector.multi_reduction <maximumf>, %4, %cst_8 [1] : vector<4x3x16xf32> to vector<4x16xf32>
    %6 = vector.shape_cast %5 : vector<4x16xf32> to vector<4x1x16xf32>
    %c0_9 = arith.constant 0 : index
    %c0_10 = arith.constant 0 : index
    %c0_11 = arith.constant 0 : index
    %7 = vector.load %arg4[%c0_9, %c0_10, %c0_11] : memref<4x6x16xf32, #tpu.memory_space<vmem>>, vector<4x1x16xf32>
    tpu.vector_store %arg4[%c0_9, %c0_10, %c0_11], %6 {strides = array<i32>} : memref<4x6x16xf32, #tpu.memory_space<vmem>>, vector<4x1x16xf32>,
    %c0_12 = arith.constant 0 : index
    %c3 = arith.constant 3 : index
    %c0_13 = arith.constant 0 : index
    %8 = vector.load %arg1[%c0_12, %c3, %c0_13] : memref<4x16x16xf32, #tpu.memory_space<vmem>>, vector<4x3x16xf32>
    %c0_14 = arith.constant 0 : index
    %c3_15 = arith.constant 3 : index
    %c0_16 = arith.constant 0 : index
    %9 = vector.load %arg2[%c0_14, %c3_15, %c0_16] : memref<4x16x16xf32, #tpu.memory_space<vmem>>, vector<4x3x16xf32>
    %10 = arith.maximumf %8, %9 : vector<4x3x16xf32>
    %cst_17 = arith.constant dense<0xFF800000> : vector<4x16xf32>
    %11 = vector.multi_reduction <maximumf>, %10, %cst_17 [1] : vector<4x3x16xf32> to vector<4x16xf32>
    %12 = vector.shape_cast %11 : vector<4x16xf32> to vector<4x1x16xf32>
    %c0_18 = arith.constant 0 : index
    %c1 = arith.constant 1 : index
    %c0_19 = arith.constant 0 : index
    %13 = vector.load %arg4[%c0_18, %c1, %c0_19] : memref<4x6x16xf32, #tpu.memory_space<vmem>>, vector<4x1x16xf32>
    tpu.vector_store %arg4[%c0_18, %c1, %c0_19], %12 {strides = array<i32>} : memref<4x6x16xf32, #tpu.memory_space<vmem>>, vector<4x1x16xf32>,
    %c0_20 = arith.constant 0 : index
    %c6 = arith.constant 6 : index
    %c0_21 = arith.constant 0 : index
    %14 = vector.load %arg1[%c0_20, %c6, %c0_21] : memref<4x16x16xf32, #tpu.memory_space<vmem>>, vector<4x3x16xf32>
    %c0_22 = arith.constant 0 : index
    %c6_23 = arith.constant 6 : index
    %c0_24 = arith.constant 0 : index
    %15 = vector.load %arg2[%c0_22, %c6_23, %c0_24] : memref<4x16x16xf32, #tpu.memory_space<vmem>>, vector<4x3x16xf32>
    %16 = arith.maximumf %14, %15 : vector<4x3x16xf32>
    %cst_25 = arith.constant dense<0xFF800000> : vector<4x16xf32>
    %17 = vector.multi_reduction <maximumf>, %16, %cst_25 [1] : vector<4x3x16xf32> to vector<4x16xf32>
    %18 = vector.shape_cast %17 : vector<4x16xf32> to vector<4x1x16xf32>
    %c0_26 = arith.constant 0 : index
    %c2 = arith.constant 2 : index
    %c0_27 = arith.constant 0 : index
    %19 = vector.load %arg4[%c0_26, %c2, %c0_27] : memref<4x6x16xf32, #tpu.memory_space<vmem>>, vector<4x1x16xf32>
    tpu.vector_store %arg4[%c0_26, %c2, %c0_27], %18 {strides = array<i32>} : memref<4x6x16xf32, #tpu.memory_space<vmem>>, vector<4x1x16xf32>,
    %c0_28 = arith.constant 0 : index
    %c9 = arith.constant 9 : index
    %c0_29 = arith.constant 0 : index
    %20 = vector.load %arg1[%c0_28, %c9, %c0_29] : memref<4x16x16xf32, #tpu.memory_space<vmem>>, vector<4x3x16xf32>
    %c0_30 = arith.constant 0 : index
    %c9_31 = arith.constant 9 : index
    %c0_32 = arith.constant 0 : index
    %21 = vector.load %arg2[%c0_30, %c9_31, %c0_32] : memref<4x16x16xf32, #tpu.memory_space<vmem>>, vector<4x3x16xf32>
    %22 = arith.maximumf %20, %21 : vector<4x3x16xf32>
    %cst_33 = arith.constant dense<0xFF800000> : vector<4x16xf32>
    %23 = vector.multi_reduction <maximumf>, %22, %cst_33 [1] : vector<4x3x16xf32> to vector<4x16xf32>
    %24 = vector.shape_cast %23 : vector<4x16xf32> to vector<4x1x16xf32>
    %c0_34 = arith.constant 0 : index
    %c3_35 = arith.constant 3 : index
    %c0_36 = arith.constant 0 : index
    %25 = vector.load %arg4[%c0_34, %c3_35, %c0_36] : memref<4x6x16xf32, #tpu.memory_space<vmem>>, vector<4x1x16xf32>
    tpu.vector_store %arg4[%c0_34, %c3_35, %c0_36], %24 {strides = array<i32>} : memref<4x6x16xf32, #tpu.memory_space<vmem>>, vector<4x1x16xf32>,
    %c0_37 = arith.constant 0 : index
    %c12 = arith.constant 12 : index
    %c0_38 = arith.constant 0 : index
    %26 = vector.load %arg1[%c0_37, %c12, %c0_38] : memref<4x16x16xf32, #tpu.memory_space<vmem>>, vector<4x3x16xf32>
    %c0_39 = arith.constant 0 : index
    %c12_40 = arith.constant 12 : index
    %c0_41 = arith.constant 0 : index
    %27 = vector.load %arg2[%c0_39, %c12_40, %c0_41] : memref<4x16x16xf32, #tpu.memory_space<vmem>>, vector<4x3x16xf32>
    %28 = arith.maximumf %26, %27 : vector<4x3x16xf32>
    %cst_42 = arith.constant dense<0xFF800000> : vector<4x16xf32>
    %29 = vector.multi_reduction <maximumf>, %28, %cst_42 [1] : vector<4x3x16xf32> to vector<4x16xf32>
    %30 = vector.shape_cast %29 : vector<4x16xf32> to vector<4x1x16xf32>
    %c0_43 = arith.constant 0 : index
    %c4 = arith.constant 4 : index
    %c0_44 = arith.constant 0 : index
    %31 = vector.load %arg4[%c0_43, %c4, %c0_44] : memref<4x6x16xf32, #tpu.memory_space<vmem>>, vector<4x1x16xf32>
    tpu.vector_store %arg4[%c0_43, %c4, %c0_44], %30 {strides = array<i32>} : memref<4x6x16xf32, #tpu.memory_space<vmem>>, vector<4x1x16xf32>,
    %c0_45 = arith.constant 0 : index
    %c15 = arith.constant 15 : index
    %c0_46 = arith.constant 0 : index
    %32 = vector.load %arg1[%c0_45, %c15, %c0_46] : memref<4x16x16xf32, #tpu.memory_space<vmem>>, vector<4x1x16xf32>
    %c0_47 = arith.constant 0 : index
    %c15_48 = arith.constant 15 : index
    %c0_49 = arith.constant 0 : index
    %33 = vector.load %arg2[%c0_47, %c15_48, %c0_49] : memref<4x16x16xf32, #tpu.memory_space<vmem>>, vector<4x1x16xf32>
    %34 = arith.maximumf %32, %33 : vector<4x1x16xf32>
    %cst_50 = arith.constant dense<0xFF800000> : vector<4x16xf32>
    %35 = vector.multi_reduction <maximumf>, %34, %cst_50 [1] : vector<4x1x16xf32> to vector<4x16xf32>
    %36 = vector.shape_cast %35 : vector<4x16xf32> to vector<4x1x16xf32>
    %c0_51 = arith.constant 0 : index
    %c5 = arith.constant 5 : index
    %c0_52 = arith.constant 0 : index
    %37 = vector.load %arg4[%c0_51, %c5, %c0_52] : memref<4x6x16xf32, #tpu.memory_space<vmem>>, vector<4x1x16xf32>
    tpu.vector_store %arg4[%c0_51, %c5, %c0_52], %36 {strides = array<i32>} : memref<4x6x16xf32, #tpu.memory_space<vmem>>, vector<4x1x16xf32>,
    %c0_53 = arith.constant 0 : index
    %c0_54 = arith.constant 0 : index
    %c0_55 = arith.constant 0 : index
    %38 = vector.load %arg4[%c0_53, %c0_54, %c0_55] : memref<4x6x16xf32, #tpu.memory_space<vmem>>, vector<4x6x3xf32>
    %cst_56 = arith.constant dense<0xFF800000> : vector<4x6xf32>
    %39 = vector.multi_reduction <maximumf>, %38, %cst_56 [2] : vector<4x6x3xf32> to vector<4x6xf32>
    %40 = vector.shape_cast %39 : vector<4x6xf32> to vector<4x6x1xf32>
    %c0_57 = arith.constant 0 : index
    %c1_58 = arith.constant 1 : index
    %c1_59 = arith.constant 1 : index
    %41 = vector.load %arg5[%c0_57, %c1_58, %c1_59] : memref<4x7x7xf32, #tpu.memory_space<vmem>>, vector<4x6x1xf32>
    tpu.vector_store %arg5[%c0_57, %c1_58, %c1_59], %40 {strides = array<i32>} : memref<4x7x7xf32, #tpu.memory_space<vmem>>, vector<4x6x1xf32>,
    %c0_60 = arith.constant 0 : index
    %c0_61 = arith.constant 0 : index
    %c3_62 = arith.constant 3 : index
    %42 = vector.load %arg4[%c0_60, %c0_61, %c3_62] : memref<4x6x16xf32, #tpu.memory_space<vmem>>, vector<4x6x3xf32>
    %cst_63 = arith.constant dense<0xFF800000> : vector<4x6xf32>
    %43 = vector.multi_reduction <maximumf>, %42, %cst_63 [2] : vector<4x6x3xf32> to vector<4x6xf32>
    %44 = vector.shape_cast %43 : vector<4x6xf32> to vector<4x6x1xf32>
    %c0_64 = arith.constant 0 : index
    %c1_65 = arith.constant 1 : index
    %c2_66 = arith.constant 2 : index
    %45 = vector.load %arg5[%c0_64, %c1_65, %c2_66] : memref<4x7x7xf32, #tpu.memory_space<vmem>>, vector<4x6x1xf32>
    tpu.vector_store %arg5[%c0_64, %c1_65, %c2_66], %44 {strides = array<i32>} : memref<4x7x7xf32, #tpu.memory_space<vmem>>, vector<4x6x1xf32>,
    %c0_67 = arith.constant 0 : index
    %c0_68 = arith.constant 0 : index
    %c6_69 = arith.constant 6 : index
    %46 = vector.load %arg4[%c0_67, %c0_68, %c6_69] : memref<4x6x16xf32, #tpu.memory_space<vmem>>, vector<4x6x3xf32>
    %cst_70 = arith.constant dense<0xFF800000> : vector<4x6xf32>
    %47 = vector.multi_reduction <maximumf>, %46, %cst_70 [2] : vector<4x6x3xf32> to vector<4x6xf32>
    %48 = vector.shape_cast %47 : vector<4x6xf32> to vector<4x6x1xf32>
    %c0_71 = arith.constant 0 : index
    %c1_72 = arith.constant 1 : index
    %c3_73 = arith.constant 3 : index
    %49 = vector.load %arg5[%c0_71, %c1_72, %c3_73] : memref<4x7x7xf32, #tpu.memory_space<vmem>>, vector<4x6x1xf32>
    tpu.vector_store %arg5[%c0_71, %c1_72, %c3_73], %48 {strides = array<i32>} : memref<4x7x7xf32, #tpu.memory_space<vmem>>, vector<4x6x1xf32>,
    %c0_74 = arith.constant 0 : index
    %c0_75 = arith.constant 0 : index
    %c9_76 = arith.constant 9 : index
    %50 = vector.load %arg4[%c0_74, %c0_75, %c9_76] : memref<4x6x16xf32, #tpu.memory_space<vmem>>, vector<4x6x3xf32>
    %cst_77 = arith.constant dense<0xFF800000> : vector<4x6xf32>
    %51 = vector.multi_reduction <maximumf>, %50, %cst_77 [2] : vector<4x6x3xf32> to vector<4x6xf32>
    %52 = vector.shape_cast %51 : vector<4x6xf32> to vector<4x6x1xf32>
    %c0_78 = arith.constant 0 : index
    %c1_79 = arith.constant 1 : index
    %c4_80 = arith.constant 4 : index
    %53 = vector.load %arg5[%c0_78, %c1_79, %c4_80] : memref<4x7x7xf32, #tpu.memory_space<vmem>>, vector<4x6x1xf32>
    tpu.vector_store %arg5[%c0_78, %c1_79, %c4_80], %52 {strides = array<i32>} : memref<4x7x7xf32, #tpu.memory_space<vmem>>, vector<4x6x1xf32>,
    %c0_81 = arith.constant 0 : index
    %c0_82 = arith.constant 0 : index
    %c12_83 = arith.constant 12 : index
    %54 = vector.load %arg4[%c0_81, %c0_82, %c12_83] : memref<4x6x16xf32, #tpu.memory_space<vmem>>, vector<4x6x3xf32>
    %cst_84 = arith.constant dense<0xFF800000> : vector<4x6xf32>
    %55 = vector.multi_reduction <maximumf>, %54, %cst_84 [2] : vector<4x6x3xf32> to vector<4x6xf32>
    %56 = vector.shape_cast %55 : vector<4x6xf32> to vector<4x6x1xf32>
    %c0_85 = arith.constant 0 : index
    %c1_86 = arith.constant 1 : index
    %c5_87 = arith.constant 5 : index
    %57 = vector.load %arg5[%c0_85, %c1_86, %c5_87] : memref<4x7x7xf32, #tpu.memory_space<vmem>>, vector<4x6x1xf32>
    tpu.vector_store %arg5[%c0_85, %c1_86, %c5_87], %56 {strides = array<i32>} : memref<4x7x7xf32, #tpu.memory_space<vmem>>, vector<4x6x1xf32>,
    %c0_88 = arith.constant 0 : index
    %c0_89 = arith.constant 0 : index
    %c15_90 = arith.constant 15 : index
    %58 = vector.load %arg4[%c0_88, %c0_89, %c15_90] : memref<4x6x16xf32, #tpu.memory_space<vmem>>, vector<4x6x1xf32>
    %cst_91 = arith.constant dense<0xFF800000> : vector<4x6xf32>
    %59 = vector.multi_reduction <maximumf>, %58, %cst_91 [2] : vector<4x6x1xf32> to vector<4x6xf32>
    %60 = vector.shape_cast %59 : vector<4x6xf32> to vector<4x6x1xf32>
    %c0_92 = arith.constant 0 : index
    %c1_93 = arith.constant 1 : index
    %c6_94 = arith.constant 6 : index
    %61 = vector.load %arg5[%c0_92, %c1_93, %c6_94] : memref<4x7x7xf32, #tpu.memory_space<vmem>>, vector<4x6x1xf32>
    tpu.vector_store %arg5[%c0_92, %c1_93, %c6_94], %60 {strides = array<i32>} : memref<4x7x7xf32, #tpu.memory_space<vmem>>, vector<4x6x1xf32>,
    %c0_95 = arith.constant 0 : index
    %c0_96 = arith.constant 0 : index
    %c0_97 = arith.constant 0 : index
    %62 = vector.load %arg5[%c0_95, %c0_96, %c0_97] : memref<4x7x7xf32, #tpu.memory_space<vmem>>, vector<4x6x6xf32>
    %c0_98 = arith.constant 0 : index
    %c0_99 = arith.constant 0 : index
    %c1_100 = arith.constant 1 : index
    %63 = vector.load %arg5[%c0_98, %c0_99, %c1_100] : memref<4x7x7xf32, #tpu.memory_space<vmem>>, vector<4x6x6xf32>
    %64 = arith.maximumf %62, %63 : vector<4x6x6xf32>
    %c0_101 = arith.constant 0 : index
    %c1_102 = arith.constant 1 : index
    %c0_103 = arith.constant 0 : index
    %65 = vector.load %arg5[%c0_101, %c1_102, %c0_103] : memref<4x7x7xf32, #tpu.memory_space<vmem>>, vector<4x6x6xf32>
    %c0_104 = arith.constant 0 : index
    %c1_105 = arith.constant 1 : index
    %c1_106 = arith.constant 1 : index
    %66 = vector.load %arg5[%c0_104, %c1_105, %c1_106] : memref<4x7x7xf32, #tpu.memory_space<vmem>>, vector<4x6x6xf32>
    %67 = arith.maximumf %65, %66 : vector<4x6x6xf32>
    %68 = arith.maximumf %64, %67 : vector<4x6x6xf32>
    %c0_107 = arith.constant 0 : index
    %c0_108 = arith.constant 0 : index
    %c0_109 = arith.constant 0 : index
    %69 = vector.load %arg3[%c0_107, %c0_108, %c0_109] : memref<4x6x6xf32, #tpu.memory_space<vmem>>, vector<4x6x6xf32>
    tpu.vector_store %arg3[%c0_107, %c0_108, %c0_109], %68 {strides = array<i32>} : memref<4x6x6xf32, #tpu.memory_space<vmem>>, vector<4x6x6xf32>,
    return
  }
  func.func @transform_0(%arg0: i32) -> (i32, i32, i32) {
    %c0_i32 = arith.constant 0 : i32
    %c0_i32_0 = arith.constant 0 : i32
    %c0_i32_1 = arith.constant 0 : i32
    return %arg0, %c0_i32, %c0_i32_0 : i32, i32, i32
  }
  func.func @transform_1(%arg0: i32) -> (i32, i32, i32) {
    %c0_i32 = arith.constant 0 : i32
    %c0_i32_0 = arith.constant 0 : i32
    %c0_i32_1 = arith.constant 0 : i32
    return %arg0, %c0_i32, %c0_i32_0 : i32, i32, i32
  }
  func.func @transform_2(%arg0: i32) -> (i32, i32, i32) {
    %c0_i32 = arith.constant 0 : i32
    %c0_i32_0 = arith.constant 0 : i32
    %c0_i32_1 = arith.constant 0 : i32
    return %arg0, %c0_i32, %c0_i32_0 : i32, i32, i32
  }
}

</mosaic_0001>

<llo_original>
// kernel: tpu_custom_call.1
$region0: #{tpu_custom_call.1}
  #allocation0 [shape = 'u32[]', space=smem, size = 0x4, offset = 0x4, fixed_abs, tag = 'smem constant byte address 0x4 - core index']
  #allocation1 [shape = 'u32[144,128]{1,0:T(1,128)}', space=vmem, size = 0x12000, scoped, tag = 'internal scratch']
  #allocation2 [shape = 'f32[4,6,16]{2,1,0:T(8,128)}', space=vmem, size = 0x4000, scoped, tag = 'scratch operand']
  #allocation3 [shape = 'f32[4,7,7]{2,1,0:T(8,128)}', space=vmem, size = 0x4000, scoped, tag = 'scratch operand']
  %s0 = inlined_call_operand.hbm [shape: f32[8,16,16], index: 0, kind: input, shape index: {}]
  %s1 = inlined_call_operand.hbm [shape: f32[8,16,16], index: 1, kind: input, shape index: {}]
  %s2 = inlined_call_operand.vmem [shape: f32[8,6,6], index: 2, kind: output, shape index: {}]
  %s3 = sld [smem:[#allocation0]]
  $region49: #{tpu_custom_call.1} parent=0
    _
  %s5 = ssub.s32 1, %s3
  %s6 = scalar_select 0, %s5, %s3
  $region1: #{tpu_custom_call.1} parent=0
    #allocation4 [shape = 'u8[65536]{0}', space=vmem, size = 0x10000, scoped, tag = 'input window, operand 0']
    #allocation5 [shape = 's32[2]{0}', space=sflag, size = 0x8, scoped, tag = 'scoped memory for tpu_custom_call.1']
    #allocation6 [shape = 'u8[65536]{0}', space=vmem, size = 0x10000, scoped, tag = 'input window, operand 1']
    #allocation7 [shape = 's32[2]{0}', space=sflag, size = 0x8, scoped, tag = 'scoped memory for tpu_custom_call.1']
    %7 = vsyncpa [#allocation5], 0
    %s8 = scalar_lea.sflag [#allocation5], 1
    %9 = vsyncpa %s8, 0
    %10 = vsyncpa [#allocation7], 0
    %s11 = scalar_lea.sflag [#allocation7], 1
    %12 = vsyncpa %s11, 0
    loop: start=0, step=1, limit=4
    $region2: #{tpu_custom_call.1} parent=1 // loop_pre_header
      _
    $region3: #{tpu_custom_call.1} parent=1 // loop_header
      %s14 = sphi 0, %s18
      %p15 = scmp.ge.s32.totalorder %s14, 4
      %s24 = sphi 0, %s26
      %s27 = sphi 0, %s24
      %s28 = sphi 0, %s27
      %s44 = sphi 0, %s28
      %s50 = sphi 0, %s52
      %s53 = sphi 0, %s50
      %s54 = sphi 0, %s53
      %s70 = sphi 0, %s54
      %s76 = sphi 0, %s78
      %s79 = sphi 0, %s76
      %s80 = sphi 0, %s79
      %s96 = sphi 0, %s80
    $region4: #{tpu_custom_call.1} parent=1 // loop_header_branch
      %17 = sbr.rel (%p15) target = $region8
    $region5: #{tpu_custom_call.1} parent=1 // loop_body
      %s19 = ssub.s32 %s14, 1
      %s20 = ssub.s32 %s14, 2
      %s21 = sadd.s32 %s14, 1
      %s22 = ssub.s32 %s14, %s21
      %p23 = scmp.eq.s32.totalorder %s22, 0
      %s25 = sadd.s32 %s24, 1
      %s26 = scalar_select %p23, %s24, %s25
      %p29 = pneg %p23
      %p30 = scmp.eq.s32.totalorder %s14, 1
      %p31 = por %p29, %p30
      %p32 = scmp.ne.s32.totalorder %s24, %s27
      %p33 = scmp.eq.s32.totalorder %s14, 0
      %p34 = por %p32, %p33
      %p35 = scmp.ne.s32.totalorder %s24, %s27
      %p36 = scmp.eq.s32.totalorder %s19, 1
      %p37 = por %p35, %p36
      %p38 = scmp.ne.s32.totalorder %s27, %s28
      %p39 = scmp.eq.s32.totalorder %s19, 0
      %p40 = por %p38, %p39
      %p41 = scmp.ne.s32.totalorder %s27, %s28
      %p42 = scmp.eq.s32.totalorder %s20, 1
      %p43 = por %p41, %p42
      %p45 = scmp.ne.s32.totalorder %s28, %s44
      %p46 = scmp.eq.s32.totalorder %s20, 0
      %p47 = por %p45, %p46
      %s48 = ssub.s32 %s14, %s21
      %p49 = scmp.eq.s32.totalorder %s48, 0
      %s51 = sadd.s32 %s50, 1
      %s52 = scalar_select %p49, %s50, %s51
      %p55 = pneg %p49
      %p56 = scmp.eq.s32.totalorder %s14, 1
      %p57 = por %p55, %p56
      %p58 = scmp.ne.s32.totalorder %s50, %s53
      %p59 = scmp.eq.s32.totalorder %s14, 0
      %p60 = por %p58, %p59
      %p61 = scmp.ne.s32.totalorder %s50, %s53
      %p62 = scmp.eq.s32.totalorder %s19, 1
      %p63 = por %p61, %p62
      %p64 = scmp.ne.s32.totalorder %s53, %s54
      %p65 = scmp.eq.s32.totalorder %s19, 0
      %p66 = por %p64, %p65
      %p67 = scmp.ne.s32.totalorder %s53, %s54
      %p68 = scmp.eq.s32.totalorder %s20, 1
      %p69 = por %p67, %p68
      %p71 = scmp.ne.s32.totalorder %s54, %s70
      %p72 = scmp.eq.s32.totalorder %s20, 0
      %p73 = por %p71, %p72
      %s74 = ssub.s32 %s14, %s21
      %p75 = scmp.eq.s32.totalorder %s74, 0
      %s77 = sadd.s32 %s76, 1
      %s78 = scalar_select %p75, %s76, %s77
      %p81 = pneg %p75
      %p82 = scmp.eq.s32.totalorder %s14, 1
      %p83 = por %p81, %p82
      %p84 = scmp.ne.s32.totalorder %s76, %s79
      %p85 = scmp.eq.s32.totalorder %s14, 0
      %p86 = por %p84, %p85
      %p87 = scmp.ne.s32.totalorder %s76, %s79
      %p88 = scmp.eq.s32.totalorder %s19, 1
      %p89 = por %p87, %p88
      %p90 = scmp.ne.s32.totalorder %s79, %s80
      %p91 = scmp.eq.s32.totalorder %s19, 0
      %p92 = por %p90, %p91
      %p93 = scmp.ne.s32.totalorder %s79, %s80
      %p94 = scmp.eq.s32.totalorder %s20, 1
      %p95 = por %p93, %p94
      %p97 = scmp.ne.s32.totalorder %s80, %s96
      %p98 = scmp.eq.s32.totalorder %s20, 0
      %p99 = por %p97, %p98
      %p100 = scmp.le.s32.totalorder 1, %s14
      %p101 = scmp.lt.s32.totalorder %s14, 3
      %p102 = pnand %p100, %p101
      %p103 = pneg %p102
      // Predicated region
      $region9: #{tpu_custom_call.1} parent=5 // pred_check
        _
      $region10: #{tpu_custom_call.1} parent=5 // pred_check_branch
        %105 = sbr.rel (%p102) target = $region12
      $region11: #{tpu_custom_call.1} parent=5 // pred_region
        %s106 = ssub.s32 %s14, 1
      $region12: #{tpu_custom_call.1} parent=5 // pred_fallthru
        _
      %p107 = scmp.lt.s32.totalorder %s14, 2
      // Predicated region
      $region13: #{tpu_custom_call.1} parent=5 // pred_check
        %p108 = pneg %p107
      $region14: #{tpu_custom_call.1} parent=5 // pred_check_branch
        %110 = sbr.rel (%p108) target = $region16
      $region15: #{tpu_custom_call.1} parent=5 // pred_region
        // Predicated region
        $region17: #{tpu_custom_call.1} parent=15 // pred_check
          %p111 = pneg %p34
        $region18: #{tpu_custom_call.1} parent=15 // pred_check_branch
          %113 = sbr.rel (%p111) target = $region20
        $region19: #{tpu_custom_call.1} parent=15 // pred_region
          %s114 = sand.u32 %s24, 1
          %s115 = scalar_lea.sflag [#allocation5], %s114
          %s116 = sand.u32 %s24, 1
          %s117 = smul.addr %s116, 64
          %s118 = scalar_lea.vmem [#allocation4], %s117
          %s119 = smul.u32 4, %s14
          %s121 = ssub.s32 1024, 1024
          %122 = vsyncadd %s115, %s121
          %s123 = smul.addr %s119, 2
          %s124 = smul.addr %s123, 128
          %s125 = scalar_lea.hbm %s0, %s124
          %s126 = sshll.u32 %s118, 4
          %s127 = int_to_ptr.vmem [resolvable:$true] %s126
          %132 = dma.hbm_to_vmem [thread:$0]  %s125, 1024, %s127, %s115, 128, 128, 8
        $region20: #{tpu_custom_call.1} parent=15 // pred_fallthru
          _
        // Predicated region
        $region21: #{tpu_custom_call.1} parent=15 // pred_check
          %p133 = pneg %p60
        $region22: #{tpu_custom_call.1} parent=15 // pred_check_branch
          %135 = sbr.rel (%p133) target = $region24
        $region23: #{tpu_custom_call.1} parent=15 // pred_region
          %s136 = sand.u32 %s50, 1
          %s137 = scalar_lea.sflag [#allocation7], %s136
          %s138 = sand.u32 %s50, 1
          %s139 = smul.addr %s138, 64
          %s140 = scalar_lea.vmem [#allocation6], %s139
          %s141 = smul.u32 4, %s14
          %s143 = ssub.s32 1024, 1024
          %144 = vsyncadd %s137, %s143
          %s145 = smul.addr %s141, 2
          %s146 = smul.addr %s145, 128
          %s147 = scalar_lea.hbm %s1, %s146
          %s148 = sshll.u32 %s140, 4
          %s149 = int_to_ptr.vmem [resolvable:$true] %s148
          %154 = dma.hbm_to_vmem [thread:$0]  %s147, 1024, %s149, %s137, 128, 128, 8
        $region24: #{tpu_custom_call.1} parent=15 // pred_fallthru
          _
      $region16: #{tpu_custom_call.1} parent=5 // pred_fallthru
        _
      %p155 = scmp.le.s32.totalorder 1, %s14
      %p156 = scmp.lt.s32.totalorder %s14, 3
      %p157 = pnand %p155, %p156
      %p158 = pneg %p157
      // Predicated region
      $region25: #{tpu_custom_call.1} parent=5 // pred_check
        _
      $region26: #{tpu_custom_call.1} parent=5 // pred_check_branch
        %160 = sbr.rel (%p157) target = $region28
      $region27: #{tpu_custom_call.1} parent=5 // pred_region
        %s161 = ssub.s32 %s14, 1
        %s162 = sand.u32 %s27, 1
        %s163 = scalar_lea.sflag [#allocation5], %s162
        %s164 = sand.u32 %s27, 1
        %s165 = smul.addr %s164, 64
        %s166 = scalar_lea.vmem [#allocation4], %s165
        // Predicated region
        $region29: #{tpu_custom_call.1} parent=27 // pred_check
          %p167 = pneg %p40
        $region30: #{tpu_custom_call.1} parent=27 // pred_check_branch
          %169 = sbr.rel (%p167) target = $region32
        $region31: #{tpu_custom_call.1} parent=27 // pred_region
          %170 = dma.done %s163, 1024
        $region32: #{tpu_custom_call.1} parent=27 // pred_fallthru
          _
        %s171 = sand.u32 %s53, 1
        %s172 = scalar_lea.sflag [#allocation7], %s171
        %s173 = sand.u32 %s53, 1
        %s174 = smul.addr %s173, 64
        %s175 = scalar_lea.vmem [#allocation6], %s174
        // Predicated region
        $region33: #{tpu_custom_call.1} parent=27 // pred_check
          %p176 = pneg %p66
        $region34: #{tpu_custom_call.1} parent=27 // pred_check_branch
          %178 = sbr.rel (%p176) target = $region36
        $region35: #{tpu_custom_call.1} parent=27 // pred_region
          %179 = dma.done %s172, 1024
        $region36: #{tpu_custom_call.1} parent=27 // pred_fallthru
          _
        %s180 = sand.u32 %s27, 1
        %s181 = scalar_lea.sflag [#allocation5], %s180
        %s182 = sand.u32 %s27, 1
        %s183 = smul.addr %s182, 64
        %s184 = scalar_lea.vmem [#allocation4], %s183
        %p185 = pneg %p40
        %p186 = pneg %p37
        %s187 = sand.u32 %s53, 1
        %s188 = scalar_lea.sflag [#allocation7], %s187
        %s189 = sand.u32 %s53, 1
        %s190 = smul.addr %s189, 64
        %s191 = scalar_lea.vmem [#allocation6], %s190
        %p192 = pneg %p66
        %p193 = pneg %p63
        %p194 = pneg %p92
        %p195 = pneg %p89
        %s196 = smul.u32 4, %s19
        %p197 = scmp.lt.s32.totalorder %s196, 7
        %s198 = scalar_select %p197, %s196, 7
        %s199 = smul.addr %s198, 8
        %s200 = scalar_lea.vmem %s2, %s199
        %s201 = smul.u32 4, %s19
        %s202 = smul.u32 4, %s19
        %s203 = smul.u32 4, %s19
        %p204 = scmp.lt.s32.totalorder %s203, 7
        %s205 = scalar_select %p204, %s203, 7
        %s206 = smul.addr %s205, 8
        %s207 = scalar_lea.vmem %s2, %s206
        %s208 = smul.u32 4, %s19
        %vm209 = vcmask 55296
        %210 = vst.msk [vmem:[#allocation3] sm:$0x7f] %vm209, -inf
        %211 = vst.msk [vmem:[#allocation3 + $0x8] sm:$0x7f] %vm209, -inf
        %212 = vst.msk [vmem:[#allocation3 + $0x10] sm:$0x7f] %vm209, -inf
        %213 = vst.msk [vmem:[#allocation3 + $0x18] sm:$0x7f] %vm209, -inf
        %v214 = vld [vmem:[%s166] sm:$0x7]
        %v215 = vld [vmem:[%s166 + $0x10] sm:$0x7]
        %v216 = vld [vmem:[%s166 + $0x20] sm:$0x7]
        %v217 = vld [vmem:[%s166 + $0x30] sm:$0x7]
        %v218 = vld [vmem:[%s175] sm:$0x7]
        %v219 = vld [vmem:[%s175 + $0x10] sm:$0x7]
        %v220 = vld [vmem:[%s175 + $0x20] sm:$0x7]
        %v221 = vld [vmem:[%s175 + $0x30] sm:$0x7]
        %v222 = vmax.f32 %v214, %v218
        %v223 = vmax.f32 %v215, %v219
        %v224 = vmax.f32 %v216, %v220
        %v225 = vmax.f32 %v217, %v221
        %vm226 = vcmask 124928
        %v227 = vsel %vm226, %v222, -inf
        %v228 = vrot.slane %v227, 4
        %v229 = vmax.f32 %v227, %v228
        %v230 = vrot.slane %v229, 2
        %v231 = vmax.f32 %v229, %v230
        %v232 = vrot.slane %v231, 1
        %v233 = vmax.f32 %v231, %v232
        %v234 = vsel %vm226, %v223, -inf
        %v235 = vrot.slane %v234, 4
        %v236 = vmax.f32 %v234, %v235
        %v237 = vrot.slane %v236, 2
        %v238 = vmax.f32 %v236, %v237
        %v239 = vrot.slane %v238, 1
        %v240 = vmax.f32 %v238, %v239
        %v241 = vsel %vm226, %v224, -inf
        %v242 = vrot.slane %v241, 4
        %v243 = vmax.f32 %v241, %v242
        %v244 = vrot.slane %v243, 2
        %v245 = vmax.f32 %v243, %v244
        %v246 = vrot.slane %v245, 1
        %v247 = vmax.f32 %v245, %v246
        %v248 = vsel %vm226, %v225, -inf
        %v249 = vrot.slane %v248, 4
        %v250 = vmax.f32 %v248, %v249
        %v251 = vrot.slane %v250, 2
        %v252 = vmax.f32 %v250, %v251
        %v253 = vrot.slane %v252, 1
        %v254 = vmax.f32 %v252, %v253
        %vm255 = vcmask 122880
        %256 = vst.msk [vmem:[#allocation2] sm:$0x1] %vm255, %v233
        %257 = vst.msk [vmem:[#allocation2 + $0x8] sm:$0x1] %vm255, %v240
        %258 = vst.msk [vmem:[#allocation2 + $0x10] sm:$0x1] %vm255, %v247
        %259 = vst.msk [vmem:[#allocation2 + $0x18] sm:$0x1] %vm255, %v254
        %v260 = vld [vmem:[%s166 + $0x3] sm:$0x7]
        %v261 = vld [vmem:[%s166 + $0x13] sm:$0x7]
        %v262 = vld [vmem:[%s166 + $0x23] sm:$0x7]
        %v263 = vld [vmem:[%s166 + $0x33] sm:$0x7]
        %v264 = vld [vmem:[%s175 + $0x3] sm:$0x7]
        %v265 = vld [vmem:[%s175 + $0x13] sm:$0x7]
        %v266 = vld [vmem:[%s175 + $0x23] sm:$0x7]
        %v267 = vld [vmem:[%s175 + $0x33] sm:$0x7]
        %v268 = vmax.f32 %v260, %v264
        %v269 = vmax.f32 %v261, %v265
        %v270 = vmax.f32 %v262, %v266
        %v271 = vmax.f32 %v263, %v267
        %v272 = vsel %vm226, %v268, -inf
        %v273 = vrot.slane %v272, 4
        %v274 = vmax.f32 %v272, %v273
        %v275 = vrot.slane %v274, 2
        %v276 = vmax.f32 %v274, %v275
        %v277 = vrot.slane %v276, 1
        %v278 = vmax.f32 %v276, %v277
        %v279 = vsel %vm226, %v269, -inf
        %v280 = vrot.slane %v279, 4
        %v281 = vmax.f32 %v279, %v280
        %v282 = vrot.slane %v281, 2
        %v283 = vmax.f32 %v281, %v282
        %v284 = vrot.slane %v283, 1
        %v285 = vmax.f32 %v283, %v284
        %v286 = vsel %vm226, %v270, -inf
        %v287 = vrot.slane %v286, 4
        %v288 = vmax.f32 %v286, %v287
        %v289 = vrot.slane %v288, 2
        %v290 = vmax.f32 %v288, %v289
        %v291 = vrot.slane %v290, 1
        %v292 = vmax.f32 %v290, %v291
        %v293 = vsel %vm226, %v271, -inf
        %v294 = vrot.slane %v293, 4
        %v295 = vmax.f32 %v293, %v294
        %v296 = vrot.slane %v295, 2
        %v297 = vmax.f32 %v295, %v296
        %v298 = vrot.slane %v297, 1
        %v299 = vmax.f32 %v297, %v298
        %300 = vst.msk [vmem:[#allocation2 + $0x1] sm:$0x1] %vm255, %v278
        %301 = vst.msk [vmem:[#allocation2 + $0x9] sm:$0x1] %vm255, %v285
        %302 = vst.msk [vmem:[#allocation2 + $0x11] sm:$0x1] %vm255, %v292
        %303 = vst.msk [vmem:[#allocation2 + $0x19] sm:$0x1] %vm255, %v299
        %v304 = vld [vmem:[%s166 + $0x6] sm:$0x7]
        %v305 = vld [vmem:[%s166 + $0x16] sm:$0x7]
        %v306 = vld [vmem:[%s166 + $0x26] sm:$0x7]
        %v307 = vld [vmem:[%s166 + $0x36] sm:$0x7]
        %v308 = vld [vmem:[%s175 + $0x6] sm:$0x7]
        %v309 = vld [vmem:[%s175 + $0x16] sm:$0x7]
        %v310 = vld [vmem:[%s175 + $0x26] sm:$0x7]
        %v311 = vld [vmem:[%s175 + $0x36] sm:$0x7]
        %v312 = vmax.f32 %v304, %v308
        %v313 = vmax.f32 %v305, %v309
        %v314 = vmax.f32 %v306, %v310
        %v315 = vmax.f32 %v307, %v311
        %v316 = vsel %vm226, %v312, -inf
        %v317 = vrot.slane %v316, 4
        %v318 = vmax.f32 %v316, %v317
        %v319 = vrot.slane %v318, 2
        %v320 = vmax.f32 %v318, %v319
        %v321 = vrot.slane %v320, 1
        %v322 = vmax.f32 %v320, %v321
        %v323 = vsel %vm226, %v313, -inf
        %v324 = vrot.slane %v323, 4
        %v325 = vmax.f32 %v323, %v324
        %v326 = vrot.slane %v325, 2
        %v327 = vmax.f32 %v325, %v326
        %v328 = vrot.slane %v327, 1
        %v329 = vmax.f32 %v327, %v328
        %v330 = vsel %vm226, %v314, -inf
        %v331 = vrot.slane %v330, 4
        %v332 = vmax.f32 %v330, %v331
        %v333 = vrot.slane %v332, 2
        %v334 = vmax.f32 %v332, %v333
        %v335 = vrot.slane %v334, 1
        %v336 = vmax.f32 %v334, %v335
        %v337 = vsel %vm226, %v315, -inf
        %v338 = vrot.slane %v337, 4
        %v339 = vmax.f32 %v337, %v338
        %v340 = vrot.slane %v339, 2
        %v341 = vmax.f32 %v339, %v340
        %v342 = vrot.slane %v341, 1
        %v343 = vmax.f32 %v341, %v342
        %344 = vst.msk [vmem:[#allocation2 + $0x2] sm:$0x1] %vm255, %v322
        %345 = vst.msk [vmem:[#allocation2 + $0xa] sm:$0x1] %vm255, %v329
        %346 = vst.msk [vmem:[#allocation2 + $0x12] sm:$0x1] %vm255, %v336
        %347 = vst.msk [vmem:[#allocation2 + $0x1a] sm:$0x1] %vm255, %v343
        %v348 = vld [vmem:[%s166 + $0x9] sm:$0x7]
        %v349 = vld [vmem:[%s166 + $0x19] sm:$0x7]
        %v350 = vld [vmem:[%s166 + $0x29] sm:$0x7]
        %v351 = vld [vmem:[%s166 + $0x39] sm:$0x7]
        %v352 = vld [vmem:[%s175 + $0x9] sm:$0x7]
        %v353 = vld [vmem:[%s175 + $0x19] sm:$0x7]
        %v354 = vld [vmem:[%s175 + $0x29] sm:$0x7]
        %v355 = vld [vmem:[%s175 + $0x39] sm:$0x7]
        %v356 = vmax.f32 %v348, %v352
        %v357 = vmax.f32 %v349, %v353
        %v358 = vmax.f32 %v350, %v354
        %v359 = vmax.f32 %v351, %v355
        %v360 = vsel %vm226, %v356, -inf
        %v361 = vrot.slane %v360, 4
        %v362 = vmax.f32 %v360, %v361
        %v363 = vrot.slane %v362, 2
        %v364 = vmax.f32 %v362, %v363
        %v365 = vrot.slane %v364, 1
        %v366 = vmax.f32 %v364, %v365
        %v367 = vsel %vm226, %v357, -inf
        %v368 = vrot.slane %v367, 4
        %v369 = vmax.f32 %v367, %v368
        %v370 = vrot.slane %v369, 2
        %v371 = vmax.f32 %v369, %v370
        %v372 = vrot.slane %v371, 1
        %v373 = vmax.f32 %v371, %v372
        %v374 = vsel %vm226, %v358, -inf
        %v375 = vrot.slane %v374, 4
        %v376 = vmax.f32 %v374, %v375
        %v377 = vrot.slane %v376, 2
        %v378 = vmax.f32 %v376, %v377
        %v379 = vrot.slane %v378, 1
        %v380 = vmax.f32 %v378, %v379
        %v381 = vsel %vm226, %v359, -inf
        %v382 = vrot.slane %v381, 4
        %v383 = vmax.f32 %v381, %v382
        %v384 = vrot.slane %v383, 2
        %v385 = vmax.f32 %v383, %v384
        %v386 = vrot.slane %v385, 1
        %v387 = vmax.f32 %v385, %v386
        %388 = vst.msk [vmem:[#allocation2 + $0x3] sm:$0x1] %vm255, %v366
        %389 = vst.msk [vmem:[#allocation2 + $0xb] sm:$0x1] %vm255, %v373
        %390 = vst.msk [vmem:[#allocation2 + $0x13] sm:$0x1] %vm255, %v380
        %391 = vst.msk [vmem:[#allocation2 + $0x1b] sm:$0x1] %vm255, %v387
        %v392 = vld [vmem:[%s166 + $0xc] sm:$0x7]
        %v393 = vld [vmem:[%s166 + $0x1c] sm:$0x7]
        %v394 = vld [vmem:[%s166 + $0x2c] sm:$0x7]
        %v395 = vld [vmem:[%s166 + $0x3c] sm:$0x7]
        %v396 = vld [vmem:[%s175 + $0xc] sm:$0x7]
        %v397 = vld [vmem:[%s175 + $0x1c] sm:$0x7]
        %v398 = vld [vmem:[%s175 + $0x2c] sm:$0x7]
        %v399 = vld [vmem:[%s175 + $0x3c] sm:$0x7]
        %v400 = vmax.f32 %v392, %v396
        %v401 = vmax.f32 %v393, %v397
        %v402 = vmax.f32 %v394, %v398
        %v403 = vmax.f32 %v395, %v399
        %v404 = vsel %vm226, %v400, -inf
        %v405 = vrot.slane %v404, 4
        %v406 = vmax.f32 %v404, %v405
        %v407 = vrot.slane %v406, 2
        %v408 = vmax.f32 %v406, %v407
        %v409 = vrot.slane %v408, 1
        %v410 = vmax.f32 %v408, %v409
        %v411 = vsel %vm226, %v401, -inf
        %v412 = vrot.slane %v411, 4
        %v413 = vmax.f32 %v411, %v412
        %v414 = vrot.slane %v413, 2
        %v415 = vmax.f32 %v413, %v414
        %v416 = vrot.slane %v415, 1
        %v417 = vmax.f32 %v415, %v416
        %v418 = vsel %vm226, %v402, -inf
        %v419 = vrot.slane %v418, 4
        %v420 = vmax.f32 %v418, %v419
        %v421 = vrot.slane %v420, 2
        %v422 = vmax.f32 %v420, %v421
        %v423 = vrot.slane %v422, 1
        %v424 = vmax.f32 %v422, %v423
        %v425 = vsel %vm226, %v403, -inf
        %v426 = vrot.slane %v425, 4
        %v427 = vmax.f32 %v425, %v426
        %v428 = vrot.slane %v427, 2
        %v429 = vmax.f32 %v427, %v428
        %v430 = vrot.slane %v429, 1
        %v431 = vmax.f32 %v429, %v430
        %432 = vst.msk [vmem:[#allocation2 + $0x4] sm:$0x1] %vm255, %v410
        %433 = vst.msk [vmem:[#allocation2 + $0xc] sm:$0x1] %vm255, %v417
        %434 = vst.msk [vmem:[#allocation2 + $0x14] sm:$0x1] %vm255, %v424
        %435 = vst.msk [vmem:[#allocation2 + $0x1c] sm:$0x1] %vm255, %v431
        %v436 = vld [vmem:[%s166 + $0xf] sm:$0x1]
        %v437 = vld [vmem:[%s166 + $0x1f] sm:$0x1]
        %v438 = vld [vmem:[%s166 + $0x2f] sm:$0x1]
        %v439 = vld [vmem:[%s166 + $0x3f] sm:$0x1]
        %v440 = vld [vmem:[%s175 + $0xf] sm:$0x1]
        %v441 = vld [vmem:[%s175 + $0x1f] sm:$0x1]
        %v442 = vld [vmem:[%s175 + $0x2f] sm:$0x1]
        %v443 = vld [vmem:[%s175 + $0x3f] sm:$0x1]
        %v444 = vmax.f32 %v436, %v440
        %v445 = vmax.f32 %v437, %v441
        %v446 = vmax.f32 %v438, %v442
        %v447 = vmax.f32 %v439, %v443
        %448 = vst.msk [vmem:[#allocation2 + $0x5] sm:$0x1] %vm255, %v444
        %449 = vst.msk [vmem:[#allocation2 + $0xd] sm:$0x1] %vm255, %v445
        %450 = vst.msk [vmem:[#allocation2 + $0x15] sm:$0x1] %vm255, %v446
        %451 = vst.msk [vmem:[#allocation2 + $0x1d] sm:$0x1] %vm255, %v447
        %v452 = vld [vmem:[#allocation2] sm:$0x3f]
        %v453 = vld [vmem:[#allocation2 + $0x8] sm:$0x3f]
        %v454 = vld [vmem:[#allocation2 + $0x10] sm:$0x3f]
        %v455 = vld [vmem:[#allocation2 + $0x18] sm:$0x3f]
        %vm456 = vcmask 21504
        %v457 = vsel %vm456, %v452, -inf
        %458 = vmax.xlane.f32.xlu0 %v457
        %v459 = vpop.xlane.xlu0 %458
        %v460 = vsel %vm456, %v453, -inf
        %461 = vmax.xlane.f32.xlu0 %v460
        %v462 = vpop.xlane.xlu0 %461
        %v463 = vsel %vm456, %v454, -inf
        %464 = vmax.xlane.f32.xlu0 %v463
        %v465 = vpop.xlane.xlu0 %464
        %v466 = vsel %vm456, %v455, -inf
        %467 = vmax.xlane.f32.xlu0 %v466
        %v468 = vpop.xlane.xlu0 %467
        %vm469 = vcmask 13320
        %470 = vst.msk [vmem:[#allocation3 + $0x1] sm:$0x3f] %vm469, %v459
        %471 = vst.msk [vmem:[#allocation3 + $0x9] sm:$0x3f] %vm469, %v462
        %472 = vst.msk [vmem:[#allocation3 + $0x11] sm:$0x3f] %vm469, %v465
        %473 = vst.msk [vmem:[#allocation3 + $0x19] sm:$0x3f] %vm469, %v468
        %v474 = vld [vmem:[#allocation2] sm:$0x3f]
        %v475 = vld [vmem:[#allocation2 + $0x8] sm:$0x3f]
        %v476 = vld [vmem:[#allocation2 + $0x10] sm:$0x3f]
        %v477 = vld [vmem:[#allocation2 + $0x18] sm:$0x3f]
        %vm478 = vcmask 46104
        %v479 = vsel %vm478, %v474, -inf
        %480 = vmax.xlane.f32.xlu0 %v479
        %v481 = vpop.xlane.xlu0 %480
        %v482 = vsel %vm478, %v475, -inf
        %483 = vmax.xlane.f32.xlu0 %v482
        %v484 = vpop.xlane.xlu0 %483
        %v485 = vsel %vm478, %v476, -inf
        %486 = vmax.xlane.f32.xlu0 %v485
        %v487 = vpop.xlane.xlu0 %486
        %v488 = vsel %vm478, %v477, -inf
        %489 = vmax.xlane.f32.xlu0 %v488
        %v490 = vpop.xlane.xlu0 %489
        %vm491 = vcmask 21520
        %492 = vst.msk [vmem:[#allocation3 + $0x1] sm:$0x3f] %vm491, %v481
        %493 = vst.msk [vmem:[#allocation3 + $0x9] sm:$0x3f] %vm491, %v484
        %494 = vst.msk [vmem:[#allocation3 + $0x11] sm:$0x3f] %vm491, %v487
        %495 = vst.msk [vmem:[#allocation3 + $0x19] sm:$0x3f] %vm491, %v490
        %v496 = vld [vmem:[#allocation2] sm:$0x3f]
        %v497 = vld [vmem:[#allocation2 + $0x8] sm:$0x3f]
        %v498 = vld [vmem:[#allocation2 + $0x10] sm:$0x3f]
        %v499 = vld [vmem:[#allocation2 + $0x18] sm:$0x3f]
        %vm500 = vcmask 70704
        %v501 = vsel %vm500, %v496, -inf
        %502 = vmax.xlane.f32.xlu0 %v501
        %v503 = vpop.xlane.xlu0 %502
        %v504 = vsel %vm500, %v497, -inf
        %505 = vmax.xlane.f32.xlu0 %v504
        %v506 = vpop.xlane.xlu0 %505
        %v507 = vsel %vm500, %v498, -inf
        %508 = vmax.xlane.f32.xlu0 %v507
        %v509 = vpop.xlane.xlu0 %508
        %v510 = vsel %vm500, %v499, -inf
        %511 = vmax.xlane.f32.xlu0 %v510
        %v512 = vpop.xlane.xlu0 %511
        %vm513 = vcmask 29720
        %514 = vst.msk [vmem:[#allocation3 + $0x1] sm:$0x3f] %vm513, %v503
        %515 = vst.msk [vmem:[#allocation3 + $0x9] sm:$0x3f] %vm513, %v506
        %516 = vst.msk [vmem:[#allocation3 + $0x11] sm:$0x3f] %vm513, %v509
        %517 = vst.msk [vmem:[#allocation3 + $0x19] sm:$0x3f] %vm513, %v512
        %v518 = vld [vmem:[#allocation2] sm:$0x3f]
        %v519 = vld [vmem:[#allocation2 + $0x8] sm:$0x3f]
        %v520 = vld [vmem:[#allocation2 + $0x10] sm:$0x3f]
        %v521 = vld [vmem:[#allocation2 + $0x18] sm:$0x3f]
        %vm522 = vcmask 95304
        %v523 = vsel %vm522, %v518, -inf
        %524 = vmax.xlane.f32.xlu0 %v523
        %v525 = vpop.xlane.xlu0 %524
        %v526 = vsel %vm522, %v519, -inf
        %527 = vmax.xlane.f32.xlu0 %v526
        %v528 = vpop.xlane.xlu0 %527
        %v529 = vsel %vm522, %v520, -inf
        %530 = vmax.xlane.f32.xlu0 %v529
        %v531 = vpop.xlane.xlu0 %530
        %v532 = vsel %vm522, %v521, -inf
        %533 = vmax.xlane.f32.xlu0 %v532
        %v534 = vpop.xlane.xlu0 %533
        %vm535 = vcmask 37920
        %536 = vst.msk [vmem:[#allocation3 + $0x1] sm:$0x3f] %vm535, %v525
        %537 = vst.msk [vmem:[#allocation3 + $0x9] sm:$0x3f] %vm535, %v528
        %538 = vst.msk [vmem:[#allocation3 + $0x11] sm:$0x3f] %vm535, %v531
        %539 = vst.msk [vmem:[#allocation3 + $0x19] sm:$0x3f] %vm535, %v534
        %v540 = vld [vmem:[#allocation2] sm:$0x3f]
        %v541 = vld [vmem:[#allocation2 + $0x8] sm:$0x3f]
        %v542 = vld [vmem:[#allocation2 + $0x10] sm:$0x3f]
        %v543 = vld [vmem:[#allocation2 + $0x18] sm:$0x3f]
        %vm544 = vcmask 119904
        %v545 = vsel %vm544, %v540, -inf
        %546 = vmax.xlane.f32.xlu0 %v545
        %v547 = vpop.xlane.xlu0 %546
        %v548 = vsel %vm544, %v541, -inf
        %549 = vmax.xlane.f32.xlu0 %v548
        %v550 = vpop.xlane.xlu0 %549
        %v551 = vsel %vm544, %v542, -inf
        %552 = vmax.xlane.f32.xlu0 %v551
        %v553 = vpop.xlane.xlu0 %552
        %v554 = vsel %vm544, %v543, -inf
        %555 = vmax.xlane.f32.xlu0 %v554
        %v556 = vpop.xlane.xlu0 %555
        %vm557 = vcmask 46120
        %558 = vst.msk [vmem:[#allocation3 + $0x1] sm:$0x3f] %vm557, %v547
        %559 = vst.msk [vmem:[#allocation3 + $0x9] sm:$0x3f] %vm557, %v550
        %560 = vst.msk [vmem:[#allocation3 + $0x11] sm:$0x3f] %vm557, %v553
        %561 = vst.msk [vmem:[#allocation3 + $0x19] sm:$0x3f] %vm557, %v556
        %v562 = vld [vmem:[#allocation2] sm:$0x3f]
        %v563 = vld [vmem:[#allocation2 + $0x8] sm:$0x3f]
        %v564 = vld [vmem:[#allocation2 + $0x10] sm:$0x3f]
        %v565 = vld [vmem:[#allocation2 + $0x18] sm:$0x3f]
        %570 = vrot.lane.b32.xlu0 %v562, 119
        %v571 = vpop.permute.xlu0 %570
        %572 = vrot.lane.b32.xlu0 %v563, 119
        %v573 = vpop.permute.xlu0 %572
        %574 = vrot.lane.b32.xlu0 %v564, 119
        %v575 = vpop.permute.xlu0 %574
        %576 = vrot.lane.b32.xlu0 %v565, 119
        %v577 = vpop.permute.xlu0 %576
        %vm582 = vcmask 54320
        %583 = vst.msk [vmem:[#allocation3 + $0x1] sm:$0x3f] %vm582, %v571
        %584 = vst.msk [vmem:[#allocation3 + $0x9] sm:$0x3f] %vm582, %v573
        %585 = vst.msk [vmem:[#allocation3 + $0x11] sm:$0x3f] %vm582, %v575
        %586 = vst.msk [vmem:[#allocation3 + $0x19] sm:$0x3f] %vm582, %v577
        %v587 = vld [vmem:[#allocation3] sm:$0x3f]
        %v588 = vld [vmem:[#allocation3 + $0x8] sm:$0x3f]
        %v589 = vld [vmem:[#allocation3 + $0x10] sm:$0x3f]
        %v590 = vld [vmem:[#allocation3 + $0x18] sm:$0x3f]
        %595 = vrot.lane.b32.xlu0 %v587, 127
        %v596 = vpop.permute.xlu0 %595
        %597 = vrot.lane.b32.xlu0 %v588, 127
        %v598 = vpop.permute.xlu0 %597
        %599 = vrot.lane.b32.xlu0 %v589, 127
        %v600 = vpop.permute.xlu0 %599
        %601 = vrot.lane.b32.xlu0 %v590, 127
        %v602 = vpop.permute.xlu0 %601
        %v607 = vmax.f32 %v587, %v596
        %v608 = vmax.f32 %v588, %v598
        %v609 = vmax.f32 %v589, %v600
        %v610 = vmax.f32 %v590, %v602
        %v611 = vld [vmem:[#allocation3 + $0x1] sm:$0x3f]
        %v612 = vld [vmem:[#allocation3 + $0x9] sm:$0x3f]
        %v613 = vld [vmem:[#allocation3 + $0x11] sm:$0x3f]
        %v614 = vld [vmem:[#allocation3 + $0x19] sm:$0x3f]
        %619 = vrot.lane.b32.xlu0 %v611, 127
        %v620 = vpop.permute.xlu0 %619
        %621 = vrot.lane.b32.xlu0 %v612, 127
        %v622 = vpop.permute.xlu0 %621
        %623 = vrot.lane.b32.xlu0 %v613, 127
        %v624 = vpop.permute.xlu0 %623
        %625 = vrot.lane.b32.xlu0 %v614, 127
        %v626 = vpop.permute.xlu0 %625
        %v631 = vmax.f32 %v611, %v620
        %v632 = vmax.f32 %v612, %v622
        %v633 = vmax.f32 %v613, %v624
        %v634 = vmax.f32 %v614, %v626
        %v635 = vmax.f32 %v607, %v631
        %v636 = vmax.f32 %v608, %v632
        %v637 = vmax.f32 %v609, %v633
        %v638 = vmax.f32 %v610, %v634
        %vm639 = vcmask 46080
        %640 = vst.msk [vmem:[%s207] sm:$0x3f] %vm639, %v635
        %641 = vst.msk [vmem:[%s207 + $0x8] sm:$0x3f] %vm639, %v636
        %642 = vst.msk [vmem:[%s207 + $0x10] sm:$0x3f] %vm639, %v637
        %643 = vst.msk [vmem:[%s207 + $0x18] sm:$0x3f] %vm639, %v638
        %s644 = smul.u32 4, %s19
        %p645 = scmp.lt.s32.totalorder %s644, 7
        %s646 = scalar_select %p645, %s644, 7
        %s647 = smul.addr %s646, 8
        %s648 = scalar_lea.vmem %s2, %s647
        // Predicated region
        $region37: #{tpu_custom_call.1} parent=27 // pred_check
          %p649 = pneg %p89
        $region38: #{tpu_custom_call.1} parent=27 // pred_check_branch
          %651 = sbr.rel (%p649) target = $region40
        $region39: #{tpu_custom_call.1} parent=27 // pred_region
          %s652 = smul.u32 4, %s19
        $region40: #{tpu_custom_call.1} parent=27 // pred_fallthru
          _
      $region28: #{tpu_custom_call.1} parent=5 // pred_fallthru
        _
      %p653 = scmp.le.s32.totalorder 2, %s14
      // Predicated region
      $region41: #{tpu_custom_call.1} parent=5 // pred_check
        %p654 = pneg %p653
      $region42: #{tpu_custom_call.1} parent=5 // pred_check_branch
        %656 = sbr.rel (%p654) target = $region44
      $region43: #{tpu_custom_call.1} parent=5 // pred_region
        %s657 = ssub.s32 %s14, 2
        // Predicated region
        $region45: #{tpu_custom_call.1} parent=43 // pred_check
          %p658 = pneg %p95
        $region46: #{tpu_custom_call.1} parent=43 // pred_check_branch
          %660 = sbr.rel (%p658) target = $region48
        $region47: #{tpu_custom_call.1} parent=43 // pred_region
          %s661 = smul.u32 4, %s20
          %p662 = scmp.lt.s32.totalorder %s661, 7
          %s663 = scalar_select %p662, %s661, 7
          %s664 = smul.addr %s663, 8
          %s665 = scalar_lea.vmem %s2, %s664
        $region48: #{tpu_custom_call.1} parent=43 // pred_fallthru
          _
      $region44: #{tpu_custom_call.1} parent=5 // pred_fallthru
        _
    $region6: #{tpu_custom_call.1} parent=1 // loop_footer
      %s18 = sadd.s32 1, %s14
    $region7: #{tpu_custom_call.1} parent=1 // loop_footer_branch
      %13 = sbr.rel target = $region3
    $region8: #{tpu_custom_call.1} parent=1 // loop_exit
      _
    %666 = vsyncpa [#allocation5], 1
    %s667 = scalar_lea.sflag [#allocation5], 1
    %668 = vsyncpa %s667, 1
    %669 = vsyncpa [#allocation7], 1
    %s670 = scalar_lea.sflag [#allocation7], 1
    %671 = vsyncpa %s670, 1

</llo_original>
